<compile_context>
chip_gen: v7x
topology: tpu7x:2x2x1
jax: 0.10.0
libtpu: 0.0.40
codegen_flags: <defaults>
</compile_context>

<pallas_src>
import math

import jax
import jax.numpy as jnp
import numpy as np
from jax import lax
from jax.experimental import pallas as pl
from jax.experimental.pallas import tpu as pltpu


def _round_up(x, m):
    return ((x + m - 1) // m) * m


def _pick_batch_tile(batch):
    """Lane-axis batch tile: big (<=512) for low per-grid-step overhead, but
    no more than ceil(B/2) rounded up to 128 so there are >=2 grid steps for
    v7x megacore sharding whenever B >= 256."""
    tb = _round_up(pl.cdiv(batch, 2), 128)
    return max(128, min(512, tb))


# ----------------------------------------------------------------------------
# Pallas kernel: full forward pass for the (default) n_hidden=0 actor.
# TODO(synk): n_hidden>0 would repeat the (Linear, LayerNorm, ReLU) block;
#             only the default n_hidden=0 configuration is implemented here.
# TODO(synk): deterministic=True (argmax of probs) and evaluate() (log_prob +
#             entropy for given actions) are not wired up in this kernel.
# ----------------------------------------------------------------------------
def _actor_kernel(x_ref, g_ref, w1_ref, b1_ref, w2_ref, b2_ref,
                  probsT_ref, packed_ref):
    """One batch tile; the batch lives on the LANE axis of every intermediate.

    x:      (TB, D)  states tile, natural layout (transpose folded into matmul)
    g:      (O, TB)  Gumbel(0,1) noise, transposed / lane-dense
    w1:     (H, D)   Linear1 weight (PyTorch (out, in) layout)
    b1:     (H, 1)
    w2:     (O, H)   Linear2 weight
    b2:     (O, 1)
    probsT: (O, TB)  softmax probabilities, transposed (lane-dense)
    packed: (2, TB)  row 0 = log_prob(action), row 1 = action (as exact f32)
    """
    x = x_ref[...]                                              # (TB, D) f32

    # Linear 1:  h^T = W1 @ x^T + b1  -> (H, TB).  Contracting both operands
    # on D (A @ B^T form) folds the tile transpose into the MXU op.
    h = lax.dot_general(w1_ref[...], x, (((1,), (1,)), ((), ())),
                        preferred_element_type=jnp.float32) + b1_ref[...]

    # LayerNorm over the hidden axis (sublane axis), eps=1e-5, no affine + ReLU.
    mean = jnp.mean(h, axis=0, keepdims=True)
    ctr = h - mean
    var = jnp.mean(ctr * ctr, axis=0, keepdims=True)
    a = jnp.maximum(ctr * lax.rsqrt(var + 1e-5), 0.0)

    # Linear 2:  logits^T = W2 @ a + b2  -> (O, TB)
    logits = jnp.dot(w2_ref[...], a,
                     preferred_element_type=jnp.float32) + b2_ref[...]

    # Numerically-stable softmax over the action axis (axis 0) + log-probs.
    m = jnp.max(logits, axis=0, keepdims=True)
    e = jnp.exp(logits - m)
    s = jnp.sum(e, axis=0, keepdims=True)
    probsT_ref[...] = e / s
    logp = (logits - m) - jnp.log(s)                            # (O, TB)

    # Categorical sample via Gumbel-max: argmax(logp + gumbel) over the action
    # axis (first index wins ties -> deterministic given the noise).
    z = logp + g_ref[...]
    zmax = jnp.max(z, axis=0, keepdims=True)
    idx = lax.broadcasted_iota(jnp.int32, z.shape, 0)
    n_act = z.shape[0]
    action = jnp.min(jnp.where(z == zmax, idx, n_act), axis=0, keepdims=True)

    # dist.log_prob(action): gather logp at the sampled row (select-reduce).
    lp = jnp.sum(jnp.where(idx == action, logp, 0.0), axis=0, keepdims=True)

    # Pack the two (1, TB) results into one lane-dense (2, TB) writeback.
    packed_ref[0:1, :] = lp
    packed_ref[1:2, :] = action.astype(jnp.float32)   # exact for out_dim < 2^24


def discrete_actor_forward(states, params, key):
    """states: (B, D) f32.
    params: W1 (H, D), b1 (H, 1), W2 (O, H), b2 (O, 1)  (PyTorch layout).
    key: jax PRNG key for the Gumbel-max categorical sample.

    Returns (action (B,) int32, log_prob (B,) f32, probsT (O, B) f32).
    NOTE: probs are returned transposed (lane-dense kernel output); use
    probsT.T only if a (B, O) view is actually required by the consumer."""
    B, D = states.shape
    H = params["W1"].shape[0]
    O = params["W2"].shape[0]

    TB = _pick_batch_tile(B)
    n_tiles = pl.cdiv(B, TB)

    # Gumbel(0,1) noise, generated once, already transposed / lane-dense.
    # (Replaces the in-kernel hardware PRNG, which has no interpret lowering.)
    gumbelT = jax.random.gumbel(key, (O, B), jnp.float32)

    flops = 2 * B * (D * H + H * O)
    transcendentals = B * (O + 2)
    bytes_accessed = 4 * (B * D + O * B + H * D + H + O * H + O   # inputs
                          + O * B + 2 * B)                        # outputs

    grid_spec = pltpu.PrefetchScalarGridSpec(
        num_scalar_prefetch=0,
        grid=(n_tiles,),
        in_specs=[
            # Streaming input in natural (B, D) layout -> no wrapper transpose
            # or pad.  If a profile ever shows exposed input DMA, add
            # pipeline_mode=pl.Buffered(3) to this spec only.
            pl.BlockSpec((TB, D), lambda i: (i, 0)),
            pl.BlockSpec((O, TB), lambda i: (0, i)),       # gumbel noise
            pl.BlockSpec((H, D), lambda i: (0, 0)),        # W1 (VMEM-resident)
            pl.BlockSpec((H, 1), lambda i: (0, 0)),        # b1
            pl.BlockSpec((O, H), lambda i: (0, 0)),        # W2
            pl.BlockSpec((O, 1), lambda i: (0, 0)),        # b2
        ],
        out_specs=(
            pl.BlockSpec((O, TB), lambda i: (0, i)),       # probs^T
            pl.BlockSpec((2, TB), lambda i: (0, i)),       # packed lp/action
        ),
    )

    probsT, packed = pl.pallas_call(
        _actor_kernel,
        out_shape=(
            jax.ShapeDtypeStruct((O, B), jnp.float32),
            jax.ShapeDtypeStruct((2, B), jnp.float32),
        ),
        grid_spec=grid_spec,
        compiler_params=pltpu.CompilerParams(
            dimension_semantics=("parallel",)),
        cost_estimate=pl.CostEstimate(
            flops=flops,
            transcendentals=transcendentals,
            bytes_accessed=bytes_accessed),
    )(states, gumbelT, params["W1"], params["b1"], params["W2"], params["b2"])

    log_prob = packed[0, :]
    action = packed[1, :].astype(jnp.int32)
    return action, log_prob, probsT


# ----------------------------------------------------------------------------
# Deterministic parameter init (orthogonal with relu gain, zero bias),
# mirroring orthogonal_init in the PyTorch module (PyTorch (out, in) layout).
# ----------------------------------------------------------------------------
def init_params(key, input_dim, hidden, out_dim):
    gain = math.sqrt(2.0)                    # nn.init.calculate_gain('relu')
    ortho = jax.nn.initializers.orthogonal(scale=gain)
    k1, k2 = jax.random.split(key)
    return {
        "W1": ortho(k1, (hidden, input_dim), jnp.float32),
        "b1": jnp.zeros((hidden, 1), jnp.float32),
        "W2": ortho(k2, (out_dim, hidden), jnp.float32),
        "b2": jnp.zeros((out_dim, 1), jnp.float32),
    }


# Pure-JAX reference of the probability head (for correctness sanity check).
def _ref_probs(states, params):
    h = states @ params["W1"].T + params["b1"].T
    mean = h.mean(-1, keepdims=True)
    var = ((h - mean) ** 2).mean(-1, keepdims=True)
    a = jnp.maximum((h - mean) / jnp.sqrt(var + 1e-5), 0.0)
    logits = a @ params["W2"].T + params["b2"].T
    return jax.nn.softmax(logits, axis=-1)


if __name__ == "__main__":
    B, D, H, O = 256, 16, 32, 8          # batch, input_dim, hidden, out_dim

    key = jax.random.PRNGKey(0)
    k_params, k_x, k_sample = jax.random.split(key, 3)

    params = init_params(k_params, D, H, O)
    states = jax.random.normal(k_x, (B, D), jnp.float32)

    action, log_prob, probsT = discrete_actor_forward(states, params, k_sample)
    jax.block_until_ready((action, log_prob, probsT))

    # Sanity checks against a plain-JAX reference.
    ref_p = np.asarray(_ref_probs(states, params))
    np.testing.assert_allclose(np.asarray(probsT).T, ref_p,
                               rtol=1e-5, atol=1e-5)
    act_np = np.asarray(action)
    assert act_np.shape == (B,)
    assert np.all(act_np >= 0) and np.all(act_np < O)
    ref_lp = np.log(ref_p)[np.arange(B), act_np]
    np.testing.assert_allclose(np.asarray(log_prob), ref_lp,
                               rtol=1e-4, atol=1e-5)

    print("KERNEL_OK")
</pallas_src>

<mosaic_0001>
module attributes {stable_mosaic.version = 11 : i64} {
  func.func @_actor_kernel(%arg0: i32, %arg1: memref<128x16xf32, #tpu.memory_space<vmem>>, %arg2: memref<8x128xf32, #tpu.memory_space<vmem>>, %arg3: memref<32x16xf32, #tpu.memory_space<vmem>>, %arg4: memref<32x1xf32, #tpu.memory_space<vmem>>, %arg5: memref<8x32xf32, #tpu.memory_space<vmem>>, %arg6: memref<8x1xf32, #tpu.memory_space<vmem>>, %arg7: memref<8x128xf32, #tpu.memory_space<vmem>>, %arg8: memref<2x128xf32, #tpu.memory_space<vmem>>) attributes {dimension_semantics = [#tpu.dimension_semantics<parallel>], iteration_bounds = array<i64: 2>, scalar_prefetch = 0 : i64, scratch_operands = 0 : i64, tpu.core_type = #tpu.core_type<tc>, window_params = [{transform_indices = @transform_0, window_bounds = array<i64: 128, 16>}, {transform_indices = @transform_1, window_bounds = array<i64: 8, 128>}, {pipeline_mode = #tpu.pipeline_mode<synchronous>, transform_indices = @transform_2, window_bounds = array<i64: 32, 16>}, {pipeline_mode = #tpu.pipeline_mode<synchronous>, transform_indices = @transform_3, window_bounds = array<i64: 32, 1>}, {pipeline_mode = #tpu.pipeline_mode<synchronous>, transform_indices = @transform_4, window_bounds = array<i64: 8, 32>}, {pipeline_mode = #tpu.pipeline_mode<synchronous>, transform_indices = @transform_5, window_bounds = array<i64: 8, 1>}, {transform_indices = @transform_6, window_bounds = array<i64: 8, 128>}, {transform_indices = @transform_7, window_bounds = array<i64: 2, 128>}]} {
    %c0 = arith.constant 0 : index
    %c0_0 = arith.constant 0 : index
    %0 = vector.load %arg1[%c0, %c0_0] : memref<128x16xf32, #tpu.memory_space<vmem>>, vector<128x16xf32>
    %c0_1 = arith.constant 0 : index
    %c0_2 = arith.constant 0 : index
    %1 = vector.load %arg3[%c0_1, %c0_2] : memref<32x16xf32, #tpu.memory_space<vmem>>, vector<32x16xf32>
    %cst = arith.constant dense<0.000000e+00> : vector<32x128xf32>
    %2 = tpu.matmul %1, %0, %cst {dimension_numbers = #tpu.dot_dimension_numbers<[1], [1], [0], [0], [0, 0, 1, 0], [], []>} : vector<32x16xf32>, vector<128x16xf32>, vector<32x128xf32> -> vector<32x128xf32>
    %c0_3 = arith.constant 0 : index
    %c0_4 = arith.constant 0 : index
    %3 = vector.load %arg4[%c0_3, %c0_4] : memref<32x1xf32, #tpu.memory_space<vmem>>, vector<32x1xf32>
    %4 = vector.broadcast %3 : vector<32x1xf32> to vector<32x128xf32>
    %5 = arith.addf %2, %4 : vector<32x128xf32>
    %cst_5 = arith.constant dense<0.000000e+00> : vector<128xf32>
    %6 = vector.multi_reduction <add>, %5, %cst_5 [0] : vector<32x128xf32> to vector<128xf32>
    %7 = vector.shape_cast %6 : vector<128xf32> to vector<1x128xf32>
    %cst_6 = arith.constant 3.200000e+01 : f32
    %8 = vector.broadcast %cst_6 : f32 to vector<1x128xf32>
    %9 = arith.divf %7, %8 : vector<1x128xf32>
    %10 = vector.broadcast %9 : vector<1x128xf32> to vector<32x128xf32>
    %11 = arith.subf %5, %10 : vector<32x128xf32>
    %12 = arith.mulf %11, %11 : vector<32x128xf32>
    %cst_7 = arith.constant dense<0.000000e+00> : vector<128xf32>
    %13 = vector.multi_reduction <add>, %12, %cst_7 [0] : vector<32x128xf32> to vector<128xf32>
    %14 = vector.shape_cast %13 : vector<128xf32> to vector<1x128xf32>
    %cst_8 = arith.constant 3.200000e+01 : f32
    %15 = vector.broadcast %cst_8 : f32 to vector<1x128xf32>
    %16 = arith.divf %14, %15 : vector<1x128xf32>
    %cst_9 = arith.constant 9.99999974E-6 : f32
    %17 = vector.broadcast %cst_9 : f32 to vector<1x128xf32>
    %18 = arith.addf %16, %17 : vector<1x128xf32>
    %19 = math.rsqrt %18 : vector<1x128xf32>
    %20 = vector.broadcast %19 : vector<1x128xf32> to vector<32x128xf32>
    %21 = arith.mulf %11, %20 : vector<32x128xf32>
    %cst_10 = arith.constant 0.000000e+00 : f32
    %22 = vector.broadcast %cst_10 : f32 to vector<32x128xf32>
    %23 = arith.maximumf %21, %22 : vector<32x128xf32>
    %c0_11 = arith.constant 0 : index
    %c0_12 = arith.constant 0 : index
    %24 = vector.load %arg5[%c0_11, %c0_12] : memref<8x32xf32, #tpu.memory_space<vmem>>, vector<8x32xf32>
    %cst_13 = arith.constant dense<0.000000e+00> : vector<8x128xf32>
    %25 = tpu.matmul %24, %23, %cst_13 {dimension_numbers = #tpu.dot_dimension_numbers<[1], [0], [0], [1], [0, 0, 1, 1], [], []>} : vector<8x32xf32>, vector<32x128xf32>, vector<8x128xf32> -> vector<8x128xf32>
    %c0_14 = arith.constant 0 : index
    %c0_15 = arith.constant 0 : index
    %26 = vector.load %arg6[%c0_14, %c0_15] : memref<8x1xf32, #tpu.memory_space<vmem>>, vector<8x1xf32>
    %27 = vector.broadcast %26 : vector<8x1xf32> to vector<8x128xf32>
    %28 = arith.addf %25, %27 : vector<8x128xf32>
    %cst_16 = arith.constant dense<0xFF800000> : vector<128xf32>
    %29 = vector.multi_reduction <maximumf>, %28, %cst_16 [0] : vector<8x128xf32> to vector<128xf32>
    %30 = vector.shape_cast %29 : vector<128xf32> to vector<1x128xf32>
    %31 = vector.broadcast %30 : vector<1x128xf32> to vector<8x128xf32>
    %32 = arith.subf %28, %31 : vector<8x128xf32>
    %33 = math.exp %32 : vector<8x128xf32>
    %cst_17 = arith.constant dense<0.000000e+00> : vector<128xf32>
    %34 = vector.multi_reduction <add>, %33, %cst_17 [0] : vector<8x128xf32> to vector<128xf32>
    %35 = vector.shape_cast %34 : vector<128xf32> to vector<1x128xf32>
    %36 = vector.broadcast %35 : vector<1x128xf32> to vector<8x128xf32>
    %37 = arith.divf %33, %36 : vector<8x128xf32>
    %c0_18 = arith.constant 0 : index
    %c0_19 = arith.constant 0 : index
    %38 = vector.load %arg7[%c0_18, %c0_19] : memref<8x128xf32, #tpu.memory_space<vmem>>, vector<8x128xf32>
    tpu.vector_store %arg7[%c0_18, %c0_19], %37 {strides = array<i32>} : memref<8x128xf32, #tpu.memory_space<vmem>>, vector<8x128xf32>,
    %39 = vector.broadcast %30 : vector<1x128xf32> to vector<8x128xf32>
    %40 = arith.subf %28, %39 : vector<8x128xf32>
    %41 = math.log %35 : vector<1x128xf32>
    %42 = vector.broadcast %41 : vector<1x128xf32> to vector<8x128xf32>
    %43 = arith.subf %40, %42 : vector<8x128xf32>
    %c0_20 = arith.constant 0 : index
    %c0_21 = arith.constant 0 : index
    %44 = vector.load %arg2[%c0_20, %c0_21] : memref<8x128xf32, #tpu.memory_space<vmem>>, vector<8x128xf32>
    %45 = arith.addf %43, %44 : vector<8x128xf32>
    %cst_22 = arith.constant dense<0xFF800000> : vector<128xf32>
    %46 = vector.multi_reduction <maximumf>, %45, %cst_22 [0] : vector<8x128xf32> to vector<128xf32>
    %47 = vector.shape_cast %46 : vector<128xf32> to vector<1x128xf32>
    %48 = tpu.iota {dimensions = array<i32: 0>} : vector<8x128xi32>
    %49 = vector.broadcast %47 : vector<1x128xf32> to vector<8x128xf32>
    %50 = arith.cmpf oeq, %45, %49 : vector<8x128xf32>
    %c8_i32 = arith.constant 8 : i32
    %51 = vector.broadcast %c8_i32 : i32 to vector<8x128xi32>
    %52 = arith.select %50, %48, %51 : vector<8x128xi1>, vector<8x128xi32>
    %cst_23 = arith.constant dense<2147483647> : vector<128xi32>
    %53 = vector.multi_reduction <minsi>, %52, %cst_23 [0] : vector<8x128xi32> to vector<128xi32>
    %54 = vector.shape_cast %53 : vector<128xi32> to vector<1x128xi32>
    %55 = vector.broadcast %54 : vector<1x128xi32> to vector<8x128xi32>
    %56 = arith.cmpi eq, %48, %55 : vector<8x128xi32>
    %cst_24 = arith.constant 0.000000e+00 : f32
    %57 = vector.broadcast %cst_24 : f32 to vector<8x128xf32>
    %58 = arith.select %56, %43, %57 : vector<8x128xi1>, vector<8x128xf32>
    %cst_25 = arith.constant dense<0.000000e+00> : vector<128xf32>
    %59 = vector.multi_reduction <add>, %58, %cst_25 [0] : vector<8x128xf32> to vector<128xf32>
    %60 = vector.shape_cast %59 : vector<128xf32> to vector<1x128xf32>
    %c0_26 = arith.constant 0 : index
    %c0_27 = arith.constant 0 : index
    %61 = vector.load %arg8[%c0_26, %c0_27] : memref<2x128xf32, #tpu.memory_space<vmem>>, vector<1x128xf32>
    tpu.vector_store %arg8[%c0_26, %c0_27], %60 {strides = array<i32>} : memref<2x128xf32, #tpu.memory_space<vmem>>, vector<1x128xf32>,
    %62 = arith.sitofp %54 : vector<1x128xi32> to vector<1x128xf32>
    %c1 = arith.constant 1 : index
    %c0_28 = arith.constant 0 : index
    %63 = vector.load %arg8[%c1, %c0_28] : memref<2x128xf32, #tpu.memory_space<vmem>>, vector<1x128xf32>
    tpu.vector_store %arg8[%c1, %c0_28], %62 {strides = array<i32>} : memref<2x128xf32, #tpu.memory_space<vmem>>, vector<1x128xf32>,
    return
  }
  func.func @transform_0(%arg0: i32) -> (i32, i32) {
    %c0_i32 = arith.constant 0 : i32
    %c0_i32_0 = arith.constant 0 : i32
    return %arg0, %c0_i32 : i32, i32
  }
  func.func @transform_1(%arg0: i32) -> (i32, i32) {
    %c0_i32 = arith.constant 0 : i32
    %c0_i32_0 = arith.constant 0 : i32
    return %c0_i32, %arg0 : i32, i32
  }
  func.func @transform_2(%arg0: i32) -> (i32, i32) {
    %c0_i32 = arith.constant 0 : i32
    %c0_i32_0 = arith.constant 0 : i32
    %c0_i32_1 = arith.constant 0 : i32
    return %c0_i32, %c0_i32_0 : i32, i32
  }
  func.func @transform_3(%arg0: i32) -> (i32, i32) {
    %c0_i32 = arith.constant 0 : i32
    %c0_i32_0 = arith.constant 0 : i32
    %c0_i32_1 = arith.constant 0 : i32
    return %c0_i32, %c0_i32_0 : i32, i32
  }
  func.func @transform_4(%arg0: i32) -> (i32, i32) {
    %c0_i32 = arith.constant 0 : i32
    %c0_i32_0 = arith.constant 0 : i32
    %c0_i32_1 = arith.constant 0 : i32
    return %c0_i32, %c0_i32_0 : i32, i32
  }
  func.func @transform_5(%arg0: i32) -> (i32, i32) {
    %c0_i32 = arith.constant 0 : i32
    %c0_i32_0 = arith.constant 0 : i32
    %c0_i32_1 = arith.constant 0 : i32
    return %c0_i32, %c0_i32_0 : i32, i32
  }
  func.func @transform_6(%arg0: i32) -> (i32, i32) {
    %c0_i32 = arith.constant 0 : i32
    %c0_i32_0 = arith.constant 0 : i32
    return %c0_i32, %arg0 : i32, i32
  }
  func.func @transform_7(%arg0: i32) -> (i32, i32) {
    %c0_i32 = arith.constant 0 : i32
    %c0_i32_0 = arith.constant 0 : i32
    return %c0_i32, %arg0 : i32, i32
  }
}

</mosaic_0001>

<llo_original>
// kernel: tpu_custom_call.1
$region0: #{tpu_custom_call.1}
  #allocation0 [shape = 'u32[]', space=smem, size = 0x4, offset = 0x4, fixed_abs, tag = 'smem constant byte address 0x4 - core index']
  #allocation1 [shape = 'u32[144,128]{1,0:T(1,128)}', space=vmem, size = 0x12000, scoped, tag = 'internal scratch']
  %s0 = inlined_call_operand.vmem [shape: f32[256,16], index: 0, kind: input, shape index: {}]
  %s1 = inlined_call_operand.vmem [shape: f32[8,256], index: 1, kind: input, shape index: {}]
  %s2 = inlined_call_operand.vmem [shape: f32[32,16], index: 2, kind: input, shape index: {}]
  %s3 = inlined_call_operand.vmem [shape: f32[32,1], index: 3, kind: input, shape index: {}]
  %s4 = inlined_call_operand.vmem [shape: f32[8,32], index: 4, kind: input, shape index: {}]
  %s5 = inlined_call_operand.vmem [shape: f32[8,1], index: 5, kind: input, shape index: {}]
  %s6 = inlined_call_operand.hbm [shape: f32[8,256], index: 6, kind: output, shape index: {0}]
  %s7 = inlined_call_operand.hbm [shape: f32[2,256], index: 7, kind: output, shape index: {1}]
  %8 = xla_tuple %s6, %s7
  %s9 = sld [smem:[#allocation0]]
  $region65: #{tpu_custom_call.1} parent=0
    _
  %s11 = ssub.s32 1, %s9
  %s12 = scalar_select 0, %s11, %s9
  $region1: #{tpu_custom_call.1} parent=0
    #allocation2 [shape = 'u8[8192]{0}', space=vmem, size = 0x2000, scoped, tag = 'output window, operand 0']
    #allocation3 [shape = 's32[2]{0}', space=sflag, size = 0x8, scoped, tag = 'scoped memory for tpu_custom_call.1']
    #allocation4 [shape = 'u8[2048]{0}', space=vmem, size = 0x800, scoped, tag = 'output window, operand 1']
    #allocation5 [shape = 's32[2]{0}', space=sflag, size = 0x8, scoped, tag = 'scoped memory for tpu_custom_call.1']
    %13 = vsyncpa [#allocation3], 0
    %s14 = scalar_lea.sflag [#allocation3], 1
    %15 = vsyncpa %s14, 0
    %16 = vsyncpa [#allocation5], 0
    %s17 = scalar_lea.sflag [#allocation5], 1
    %18 = vsyncpa %s17, 0
    loop: start=0, step=1, limit=4
    $region2: #{tpu_custom_call.1} parent=1 // loop_pre_header
      _
    $region3: #{tpu_custom_call.1} parent=1 // loop_header
      %s20 = sphi 0, %s24
      %p21 = scmp.ge.s32.totalorder %s20, 4
      %s30 = sphi 0, %s32
      %s33 = sphi 0, %s30
      %s34 = sphi 0, %s33
      %s50 = sphi 0, %s34
      %s56 = sphi 0, %s58
      %s59 = sphi 0, %s56
      %s60 = sphi 0, %s59
      %s76 = sphi 0, %s60
      %s80 = sphi 0, %s80
      %s82 = sphi 0, %s80
      %s83 = sphi 0, %s82
      %s97 = sphi 0, %s83
      %s101 = sphi 0, %s101
      %s103 = sphi 0, %s101
      %s104 = sphi 0, %s103
      %s118 = sphi 0, %s104
      %s122 = sphi 0, %s122
      %s124 = sphi 0, %s122
      %s125 = sphi 0, %s124
      %s139 = sphi 0, %s125
      %s143 = sphi 0, %s143
      %s145 = sphi 0, %s143
      %s146 = sphi 0, %s145
      %s160 = sphi 0, %s146
      %s166 = sphi 0, %s168
      %s169 = sphi 0, %s166
      %s170 = sphi 0, %s169
      %s186 = sphi 0, %s170
      %s192 = sphi 0, %s194
      %s195 = sphi 0, %s192
      %s196 = sphi 0, %s195
      %s212 = sphi 0, %s196
    $region4: #{tpu_custom_call.1} parent=1 // loop_header_branch
      %23 = sbr.rel (%p21) target = $region8
    $region5: #{tpu_custom_call.1} parent=1 // loop_body
      %s25 = ssub.s32 %s20, 1
      %s26 = ssub.s32 %s20, 2
      %s27 = sadd.s32 %s20, 1
      %s28 = ssub.s32 %s20, %s27
      %p29 = scmp.eq.s32.totalorder %s28, 0
      %s31 = sadd.s32 %s30, 1
      %s32 = scalar_select %p29, %s30, %s31
      %p35 = pneg %p29
      %p36 = scmp.eq.s32.totalorder %s20, 1
      %p37 = por %p35, %p36
      %p38 = scmp.ne.s32.totalorder %s30, %s33
      %p39 = scmp.eq.s32.totalorder %s20, 0
      %p40 = por %p38, %p39
      %p41 = scmp.ne.s32.totalorder %s30, %s33
      %p42 = scmp.eq.s32.totalorder %s25, 1
      %p43 = por %p41, %p42
      %p44 = scmp.ne.s32.totalorder %s33, %s34
      %p45 = scmp.eq.s32.totalorder %s25, 0
      %p46 = por %p44, %p45
      %p47 = scmp.ne.s32.totalorder %s33, %s34
      %p48 = scmp.eq.s32.totalorder %s26, 1
      %p49 = por %p47, %p48
      %p51 = scmp.ne.s32.totalorder %s34, %s50
      %p52 = scmp.eq.s32.totalorder %s26, 0
      %p53 = por %p51, %p52
      %s54 = ssub.s32 %s20, %s27
      %p55 = scmp.eq.s32.totalorder %s54, 0
      %s57 = sadd.s32 %s56, 1
      %s58 = scalar_select %p55, %s56, %s57
      %p61 = pneg %p55
      %p62 = scmp.eq.s32.totalorder %s20, 1
      %p63 = por %p61, %p62
      %p64 = scmp.ne.s32.totalorder %s56, %s59
      %p65 = scmp.eq.s32.totalorder %s20, 0
      %p66 = por %p64, %p65
      %p67 = scmp.ne.s32.totalorder %s56, %s59
      %p68 = scmp.eq.s32.totalorder %s25, 1
      %p69 = por %p67, %p68
      %p70 = scmp.ne.s32.totalorder %s59, %s60
      %p71 = scmp.eq.s32.totalorder %s25, 0
      %p72 = por %p70, %p71
      %p73 = scmp.ne.s32.totalorder %s59, %s60
      %p74 = scmp.eq.s32.totalorder %s26, 1
      %p75 = por %p73, %p74
      %p77 = scmp.ne.s32.totalorder %s60, %s76
      %p78 = scmp.eq.s32.totalorder %s26, 0
      %p79 = por %p77, %p78
      %s81 = sadd.s32 %s80, 1
      %p84 = scmp.eq.s32.totalorder %s20, 1
      %p85 = scmp.ne.s32.totalorder %s80, %s82
      %p86 = scmp.eq.s32.totalorder %s20, 0
      %p87 = por %p85, %p86
      %p88 = scmp.ne.s32.totalorder %s80, %s82
      %p89 = scmp.eq.s32.totalorder %s25, 1
      %p90 = por %p88, %p89
      %p91 = scmp.ne.s32.totalorder %s82, %s83
      %p92 = scmp.eq.s32.totalorder %s25, 0
      %p93 = por %p91, %p92
      %p94 = scmp.ne.s32.totalorder %s82, %s83
      %p95 = scmp.eq.s32.totalorder %s26, 1
      %p96 = por %p94, %p95
      %p98 = scmp.ne.s32.totalorder %s83, %s97
      %p99 = scmp.eq.s32.totalorder %s26, 0
      %p100 = por %p98, %p99
      %s102 = sadd.s32 %s101, 1
      %p105 = scmp.eq.s32.totalorder %s20, 1
      %p106 = scmp.ne.s32.totalorder %s101, %s103
      %p107 = scmp.eq.s32.totalorder %s20, 0
      %p108 = por %p106, %p107
      %p109 = scmp.ne.s32.totalorder %s101, %s103
      %p110 = scmp.eq.s32.totalorder %s25, 1
      %p111 = por %p109, %p110
      %p112 = scmp.ne.s32.totalorder %s103, %s104
      %p113 = scmp.eq.s32.totalorder %s25, 0
      %p114 = por %p112, %p113
      %p115 = scmp.ne.s32.totalorder %s103, %s104
      %p116 = scmp.eq.s32.totalorder %s26, 1
      %p117 = por %p115, %p116
      %p119 = scmp.ne.s32.totalorder %s104, %s118
      %p120 = scmp.eq.s32.totalorder %s26, 0
      %p121 = por %p119, %p120
      %s123 = sadd.s32 %s122, 1
      %p126 = scmp.eq.s32.totalorder %s20, 1
      %p127 = scmp.ne.s32.totalorder %s122, %s124
      %p128 = scmp.eq.s32.totalorder %s20, 0
      %p129 = por %p127, %p128
      %p130 = scmp.ne.s32.totalorder %s122, %s124
      %p131 = scmp.eq.s32.totalorder %s25, 1
      %p132 = por %p130, %p131
      %p133 = scmp.ne.s32.totalorder %s124, %s125
      %p134 = scmp.eq.s32.totalorder %s25, 0
      %p135 = por %p133, %p134
      %p136 = scmp.ne.s32.totalorder %s124, %s125
      %p137 = scmp.eq.s32.totalorder %s26, 1
      %p138 = por %p136, %p137
      %p140 = scmp.ne.s32.totalorder %s125, %s139
      %p141 = scmp.eq.s32.totalorder %s26, 0
      %p142 = por %p140, %p141
      %s144 = sadd.s32 %s143, 1
      %p147 = scmp.eq.s32.totalorder %s20, 1
      %p148 = scmp.ne.s32.totalorder %s143, %s145
      %p149 = scmp.eq.s32.totalorder %s20, 0
      %p150 = por %p148, %p149
      %p151 = scmp.ne.s32.totalorder %s143, %s145
      %p152 = scmp.eq.s32.totalorder %s25, 1
      %p153 = por %p151, %p152
      %p154 = scmp.ne.s32.totalorder %s145, %s146
      %p155 = scmp.eq.s32.totalorder %s25, 0
      %p156 = por %p154, %p155
      %p157 = scmp.ne.s32.totalorder %s145, %s146
      %p158 = scmp.eq.s32.totalorder %s26, 1
      %p159 = por %p157, %p158
      %p161 = scmp.ne.s32.totalorder %s146, %s160
      %p162 = scmp.eq.s32.totalorder %s26, 0
      %p163 = por %p161, %p162
      %s164 = ssub.s32 %s20, %s27
      %p165 = scmp.eq.s32.totalorder %s164, 0
      %s167 = sadd.s32 %s166, 1
      %s168 = scalar_select %p165, %s166, %s167
      %p171 = pneg %p165
      %p172 = scmp.eq.s32.totalorder %s20, 1
      %p173 = por %p171, %p172
      %p174 = scmp.ne.s32.totalorder %s166, %s169
      %p175 = scmp.eq.s32.totalorder %s20, 0
      %p176 = por %p174, %p175
      %p177 = scmp.ne.s32.totalorder %s166, %s169
      %p178 = scmp.eq.s32.totalorder %s25, 1
      %p179 = por %p177, %p178
      %p180 = scmp.ne.s32.totalorder %s169, %s170
      %p181 = scmp.eq.s32.totalorder %s25, 0
      %p182 = por %p180, %p181
      %p183 = scmp.ne.s32.totalorder %s169, %s170
      %p184 = scmp.eq.s32.totalorder %s26, 1
      %p185 = por %p183, %p184
      %p187 = scmp.ne.s32.totalorder %s170, %s186
      %p188 = scmp.eq.s32.totalorder %s26, 0
      %p189 = por %p187, %p188
      %s190 = ssub.s32 %s20, %s27
      %p191 = scmp.eq.s32.totalorder %s190, 0
      %s193 = sadd.s32 %s192, 1
      %s194 = scalar_select %p191, %s192, %s193
      %p197 = pneg %p191
      %p198 = scmp.eq.s32.totalorder %s20, 1
      %p199 = por %p197, %p198
      %p200 = scmp.ne.s32.totalorder %s192, %s195
      %p201 = scmp.eq.s32.totalorder %s20, 0
      %p202 = por %p200, %p201
      %p203 = scmp.ne.s32.totalorder %s192, %s195
      %p204 = scmp.eq.s32.totalorder %s25, 1
      %p205 = por %p203, %p204
      %p206 = scmp.ne.s32.totalorder %s195, %s196
      %p207 = scmp.eq.s32.totalorder %s25, 0
      %p208 = por %p206, %p207
      %p209 = scmp.ne.s32.totalorder %s195, %s196
      %p210 = scmp.eq.s32.totalorder %s26, 1
      %p211 = por %p209, %p210
      %p213 = scmp.ne.s32.totalorder %s196, %s212
      %p214 = scmp.eq.s32.totalorder %s26, 0
      %p215 = por %p213, %p214
      %p216 = scmp.le.s32.totalorder 1, %s20
      %p217 = scmp.lt.s32.totalorder %s20, 3
      %p218 = pnand %p216, %p217
      %p219 = pneg %p218
      // Predicated region
      $region9: #{tpu_custom_call.1} parent=5 // pred_check
        _
      $region10: #{tpu_custom_call.1} parent=5 // pred_check_branch
        %221 = sbr.rel (%p218) target = $region12
      $region11: #{tpu_custom_call.1} parent=5 // pred_region
        %s222 = ssub.s32 %s20, 1
        // Predicated region
        $region13: #{tpu_custom_call.1} parent=11 // pred_check
          %p223 = pneg %p93
        $region14: #{tpu_custom_call.1} parent=11 // pred_check_branch
          %225 = sbr.rel (%p223) target = $region16
        $region15: #{tpu_custom_call.1} parent=11 // pred_region
          _
        $region16: #{tpu_custom_call.1} parent=11 // pred_fallthru
          _
        // Predicated region
        $region17: #{tpu_custom_call.1} parent=11 // pred_check
          %p226 = pneg %p114
        $region18: #{tpu_custom_call.1} parent=11 // pred_check_branch
          %228 = sbr.rel (%p226) target = $region20
        $region19: #{tpu_custom_call.1} parent=11 // pred_region
          _
        $region20: #{tpu_custom_call.1} parent=11 // pred_fallthru
          _
        // Predicated region
        $region21: #{tpu_custom_call.1} parent=11 // pred_check
          %p229 = pneg %p135
        $region22: #{tpu_custom_call.1} parent=11 // pred_check_branch
          %231 = sbr.rel (%p229) target = $region24
        $region23: #{tpu_custom_call.1} parent=11 // pred_region
          _
        $region24: #{tpu_custom_call.1} parent=11 // pred_fallthru
          _
        // Predicated region
        $region25: #{tpu_custom_call.1} parent=11 // pred_check
          %p232 = pneg %p156
        $region26: #{tpu_custom_call.1} parent=11 // pred_check_branch
          %234 = sbr.rel (%p232) target = $region28
        $region27: #{tpu_custom_call.1} parent=11 // pred_region
          _
        $region28: #{tpu_custom_call.1} parent=11 // pred_fallthru
          _
      $region12: #{tpu_custom_call.1} parent=5 // pred_fallthru
        _
      %p235 = scmp.lt.s32.totalorder %s20, 2
      // Predicated region
      $region29: #{tpu_custom_call.1} parent=5 // pred_check
        %p236 = pneg %p235
      $region30: #{tpu_custom_call.1} parent=5 // pred_check_branch
        %238 = sbr.rel (%p236) target = $region32
      $region31: #{tpu_custom_call.1} parent=5 // pred_region
        // Predicated region
        $region33: #{tpu_custom_call.1} parent=31 // pred_check
          %p239 = pneg %p40
        $region34: #{tpu_custom_call.1} parent=31 // pred_check_branch
          %241 = sbr.rel (%p239) target = $region36
        $region35: #{tpu_custom_call.1} parent=31 // pred_region
          %s242 = smul.u32 16, %s20
          %p243 = scmp.lt.s32.totalorder %s242, 31
          %s244 = scalar_select %p243, %s242, 31
          %s245 = smul.addr %s244, 8
          %s246 = scalar_lea.vmem %s0, %s245
          %s247 = smul.u32 16, %s20
        $region36: #{tpu_custom_call.1} parent=31 // pred_fallthru
          _
        // Predicated region
        $region37: #{tpu_custom_call.1} parent=31 // pred_check
          %p248 = pneg %p66
        $region38: #{tpu_custom_call.1} parent=31 // pred_check_branch
          %250 = sbr.rel (%p248) target = $region40
        $region39: #{tpu_custom_call.1} parent=31 // pred_region
          %p251 = scmp.lt.s32.totalorder %s20, 1
          %s252 = scalar_select %p251, %s20, 1
          %s253 = smul.addr %s252, 8
          %s254 = scalar_lea.vmem %s1, %s253
        $region40: #{tpu_custom_call.1} parent=31 // pred_fallthru
          _
      $region32: #{tpu_custom_call.1} parent=5 // pred_fallthru
        _
      %p255 = scmp.le.s32.totalorder 1, %s20
      %p256 = scmp.lt.s32.totalorder %s20, 3
      %p257 = pnand %p255, %p256
      %p258 = pneg %p257
      // Predicated region
      $region41: #{tpu_custom_call.1} parent=5 // pred_check
        _
      $region42: #{tpu_custom_call.1} parent=5 // pred_check_branch
        %260 = sbr.rel (%p257) target = $region44
      $region43: #{tpu_custom_call.1} parent=5 // pred_region
        %s261 = ssub.s32 %s20, 1
        %s262 = smul.u32 16, %s25
        %p263 = scmp.lt.s32.totalorder %s262, 31
        %s264 = scalar_select %p263, %s262, 31
        %s265 = smul.addr %s264, 8
        %s266 = scalar_lea.vmem %s0, %s265
        %p267 = pneg %p46
        %p268 = pneg %p43
        %p269 = scmp.lt.s32.totalorder %s25, 1
        %s270 = scalar_select %p269, %s25, 1
        %s271 = smul.addr %s270, 8
        %s272 = scalar_lea.vmem %s1, %s271
        %p273 = pneg %p72
        %p274 = pneg %p69
        %p275 = pneg %p93
        %p276 = pneg %p90
        %p277 = pneg %p114
        %p278 = pneg %p111
        %p279 = pneg %p135
        %p280 = pneg %p132
        %p281 = pneg %p156
        %p282 = pneg %p153
        %p283 = pneg %p182
        %p284 = pneg %p179
        %s285 = sand.u32 %s169, 1
        %s286 = scalar_lea.sflag [#allocation3], %s285
        %s287 = sand.u32 %s169, 1
        %s288 = smul.addr %s287, 8
        %s289 = scalar_lea.vmem [#allocation2], %s288
        %p290 = pneg %p208
        %p291 = pneg %p205
        %s292 = sand.u32 %s195, 1
        %s293 = scalar_lea.sflag [#allocation5], %s292
        %s294 = sand.u32 %s195, 1
        %s295 = smul.addr %s294, 2
        %s296 = scalar_lea.vmem [#allocation4], %s295
        %s297 = smul.u32 16, %s25
        %p298 = scmp.lt.s32.totalorder %s297, 31
        %s299 = scalar_select %p298, %s297, 31
        %s300 = smul.addr %s299, 8
        %s301 = scalar_lea.vmem %s0, %s300
        %s302 = smul.u32 16, %s25
        %p303 = scmp.lt.s32.totalorder %s25, 1
        %s304 = scalar_select %p303, %s25, 1
        %s305 = smul.addr %s304, 8
        %s306 = scalar_lea.vmem %s1, %s305
        %v307 = vld [vmem:[%s301] sm:$0xff]
        %v308 = vld [vmem:[%s301 + $0x8] sm:$0xff]
        %v309 = vld [vmem:[%s301 + $0x10] sm:$0xff]
        %v310 = vld [vmem:[%s301 + $0x18] sm:$0xff]
        %v311 = vld [vmem:[%s301 + $0x20] sm:$0xff]
        %v312 = vld [vmem:[%s301 + $0x28] sm:$0xff]
        %v313 = vld [vmem:[%s301 + $0x30] sm:$0xff]
        %v314 = vld [vmem:[%s301 + $0x38] sm:$0xff]
        %v315 = vld [vmem:[%s301 + $0x40] sm:$0xff]
        %v316 = vld [vmem:[%s301 + $0x48] sm:$0xff]
        %v317 = vld [vmem:[%s301 + $0x50] sm:$0xff]
        %v318 = vld [vmem:[%s301 + $0x58] sm:$0xff]
        %v319 = vld [vmem:[%s301 + $0x60] sm:$0xff]
        %v320 = vld [vmem:[%s301 + $0x68] sm:$0xff]
        %v321 = vld [vmem:[%s301 + $0x70] sm:$0xff]
        %v322 = vld [vmem:[%s301 + $0x78] sm:$0xff]
        %v323 = vld [vmem:[%s2] sm:$0xff]
        %v324 = vld [vmem:[%s2 + $0x8] sm:$0xff]
        %v325 = vld [vmem:[%s2 + $0x10] sm:$0xff]
        %v326 = vld [vmem:[%s2 + $0x18] sm:$0xff]
        %v327 = vld [vmem:[%s3] sm:$0xff]
        %v328 = vld [vmem:[%s3 + $0x8] sm:$0xff]
        %v329 = vld [vmem:[%s3 + $0x10] sm:$0xff]
        %v330 = vld [vmem:[%s3 + $0x18] sm:$0xff]
        %332 = vset.pattern.permute.xlu0 0
        %333 = vperm.xlu0 %332, %v327
        %v334 = vpop.permute.xlu0 %333
        %337 = vset.pattern.permute.xlu0 0
        %338 = vperm.xlu0 %337, %v328
        %v339 = vpop.permute.xlu0 %338
        %342 = vset.pattern.permute.xlu0 0
        %343 = vperm.xlu0 %342, %v329
        %v344 = vpop.permute.xlu0 %343
        %347 = vset.pattern.permute.xlu0 0
        %348 = vperm.xlu0 %347, %v330
        %v349 = vpop.permute.xlu0 %348
        %vm351 = vcmask 130048
        %v353 = vsel %vm351, %v323, 0
        %v356 = vsel %vm351, %v324, 0
        %v359 = vsel %vm351, %v325, 0
        %v362 = vsel %vm351, %v326, 0
        %v365 = vsel %vm351, %v307, 0
        %v368 = vsel %vm351, %v308, 0
        %v371 = vsel %vm351, %v309, 0
        %v374 = vsel %vm351, %v310, 0
        %v377 = vsel %vm351, %v311, 0
        %v380 = vsel %vm351, %v312, 0
        %v383 = vsel %vm351, %v313, 0
        %v386 = vsel %vm351, %v314, 0
        %v389 = vsel %vm351, %v315, 0
        %v392 = vsel %vm351, %v316, 0
        %v395 = vsel %vm351, %v317, 0
        %v398 = vsel %vm351, %v318, 0
        %v401 = vsel %vm351, %v319, 0
        %v404 = vsel %vm351, %v320, 0
        %v407 = vsel %vm351, %v321, 0
        %v410 = vsel %vm351, %v322, 0
        %412 = vmatprep.subr.mxu0 0.0
        %413 = vmatpush1.xpose.msra.mxu0 %v365
        %414 = vmatprep.subr.mxu0 0.0
        %415 = vmatpush1.xpose.msra.mxu0 %v368
        %416 = vmatprep.subr.mxu0 0.0
        %417 = vmatpush1.xpose.msra.mxu0 %v371
        %418 = vmatprep.subr.mxu0 0.0
        %419 = vmatpush1.xpose.msra.mxu0 %v374
        %420 = vmatprep.subr.mxu0 0.0
        %421 = vmatpush1.xpose.msra.mxu0 %v377
        %422 = vmatprep.subr.mxu0 0.0
        %423 = vmatpush1.xpose.msra.mxu0 %v380
        %424 = vmatprep.subr.mxu0 0.0
        %425 = vmatpush1.xpose.msra.mxu0 %v383
        %426 = vmatprep.subr.mxu0 0.0
        %427 = vmatpush1.xpose.msra.mxu0 %v386
        %428 = vmatprep.subr.mxu0 0.0
        %429 = vmatpush1.xpose.msra.mxu0 %v389
        %430 = vmatprep.subr.mxu0 0.0
        %431 = vmatpush1.xpose.msra.mxu0 %v392
        %432 = vmatprep.subr.mxu0 0.0
        %433 = vmatpush1.xpose.msra.mxu0 %v395
        %434 = vmatprep.subr.mxu0 0.0
        %435 = vmatpush1.xpose.msra.mxu0 %v398
        %436 = vmatprep.subr.mxu0 0.0
        %437 = vmatpush1.xpose.msra.mxu0 %v401
        %438 = vmatprep.subr.mxu0 0.0
        %439 = vmatpush1.xpose.msra.mxu0 %v404
        %440 = vmatprep.subr.mxu0 0.0
        %441 = vmatpush1.xpose.msra.mxu0 %v407
        %442 = vmatprep.subr.mxu0 0.0
        %443 = vmatpush1.xpose.msra.mxu0 %v410
        %444 = vmatprep.subr.mxu0 0.0
        %445 = vmatpush1.xpose.msra.mxu0 0.0
        %446 = vmatprep.subr.mxu0 0.0
        %447 = vmatpush1.xpose.msra.mxu0 0.0
        %448 = vmatprep.subr.mxu0 0.0
        %449 = vmatpush1.xpose.msra.mxu0 0.0
        %450 = vmatprep.subr.mxu0 0.0
        %451 = vmatpush1.xpose.msra.mxu0 0.0
        %452 = vmatprep.subr.mxu0 0.0
        %453 = vmatpush1.xpose.msra.mxu0 0.0
        %454 = vmatprep.subr.mxu0 0.0
        %455 = vmatpush1.xpose.msra.mxu0 0.0
        %456 = vmatprep.subr.mxu0 0.0
        %457 = vmatpush1.xpose.msra.mxu0 0.0
        %458 = vmatprep.subr.mxu0 0.0
        %459 = vmatpush1.xpose.msra.mxu0 0.0
        %460 = vmatprep.subr.mxu0 0.0
        %461 = vmatpush1.xpose.msra.mxu0 0.0
        %462 = vmatprep.subr.mxu0 0.0
        %463 = vmatpush1.xpose.msra.mxu0 0.0
        %464 = vmatprep.subr.mxu0 0.0
        %465 = vmatpush1.xpose.msra.mxu0 0.0
        %466 = vmatprep.subr.mxu0 0.0
        %467 = vmatpush1.xpose.msra.mxu0 0.0
        %468 = vmatprep.subr.mxu0 0.0
        %469 = vmatpush1.xpose.msra.mxu0 0.0
        %470 = vmatprep.subr.mxu0 0.0
        %471 = vmatpush1.xpose.msra.mxu0 0.0
        %472 = vmatprep.subr.mxu0 0.0
        %473 = vmatpush1.xpose.msra.mxu0 0.0
        %474 = vmatprep.subr.mxu0 0.0
        %475 = vmatpush1.xpose.msra.mxu0 0.0
        %476 = vmatprep.mubr.f32.mxu0 0.0
        %477 = vmatmul.mubr.f32.gmra.mrb[0].mxu0 %v353
        %v478 = vpop.f32.mrb[0].mxu0
        %v479 = vadd.f32 %v334, %v478
        %v480 = vpop.f32.mrb[0].mxu0
        %481 = vmatprep.mubr.f32.mxu0 0.0
        %482 = vmatmul.mubr.f32.gmra.mrb[0].mxu0 %v356
        %v483 = vpop.f32.mrb[0].mxu0
        %v484 = vadd.f32 %v339, %v483
        %v485 = vpop.f32.mrb[0].mxu0
        %486 = vmatprep.mubr.f32.mxu0 0.0
        %487 = vmatmul.mubr.f32.gmra.mrb[0].mxu0 %v359
        %v488 = vpop.f32.mrb[0].mxu0
        %v489 = vadd.f32 %v344, %v488
        %v490 = vpop.f32.mrb[0].mxu0
        %491 = vmatprep.mubr.f32.mxu0 0.0
        %492 = vmatmul.mubr.f32.gmra.mrb[0].mxu0 %v362
        %v493 = vpop.f32.mrb[0].mxu0
        %v494 = vadd.f32 %v349, %v493
        %v495 = vpop.f32.mrb[0].mxu0
        %496 = vdwg.mxu0
        %v497 = vadd.f32 %v479, %v484
        %v498 = vadd.f32 %v497, %v489
        %v499 = vadd.f32 %v498, %v494
        %v500 = vrot.slane %v499, 4
        %v501 = vadd.f32 %v499, %v500
        %v502 = vrot.slane %v501, 2
        %v503 = vadd.f32 %v501, %v502
        %v504 = vrot.slane %v503, 1
        %v505 = vadd.f32 %v503, %v504
        %v506 = vrcp.pop 32.0
        %v507 = vmul.f32 %v505, %v506
        %v508 = vsub.f32 %v479, %v507
        %v509 = vsub.f32 %v484, %v507
        %v510 = vsub.f32 %v489, %v507
        %v511 = vsub.f32 %v494, %v507
        %v512 = vmul.f32 %v508, %v508
        %v513 = vmul.f32 %v509, %v509
        %v514 = vmul.f32 %v510, %v510
        %v515 = vmul.f32 %v511, %v511
        %v516 = vadd.f32 %v512, %v513
        %v517 = vadd.f32 %v516, %v514
        %v518 = vadd.f32 %v517, %v515
        %v519 = vrot.slane %v518, 4
        %v520 = vadd.f32 %v518, %v519
        %v521 = vrot.slane %v520, 2
        %v522 = vadd.f32 %v520, %v521
        %v523 = vrot.slane %v522, 1
        %v524 = vadd.f32 %v522, %v523
        %v525 = vmul.f32 %v524, %v506
        %v526 = vadd.f32 %v525, 1e-05
        %v527 = vrsqrt.pop %v526
        %v528 = vmul.f32 %v508, %v527
        %v529 = vmul.f32 %v509, %v527
        %v530 = vmul.f32 %v510, %v527
        %v531 = vmul.f32 %v511, %v527
        %v532 = vmax.f32 %v528, 0.0
        %v533 = vmax.f32 %v529, 0.0
        %v534 = vmax.f32 %v530, 0.0
        %v535 = vmax.f32 %v531, 0.0
        %v536 = vld [vmem:[%s4] sm:$0xff]
        %v537 = vld [vmem:[%s5] sm:$0xff]
        %539 = vset.pattern.permute.xlu0 0
        %540 = vperm.xlu0 %539, %v537
        %v541 = vpop.permute.xlu0 %540
        %vm543 = vcmask 261120
        %v545 = vsel %vm543, %v536, 0
        %547 = vmatprep.subr.mxu0 0.0
        %548 = vmatpush1.msra.mxu0 %v532
        %549 = vmatprep.subr.mxu0 0.0
        %550 = vmatpush1.msra.mxu0 %v533
        %551 = vmatprep.subr.mxu0 0.0
        %552 = vmatpush1.msra.mxu0 %v534
        %553 = vmatprep.subr.mxu0 0.0
        %554 = vmatpush1.msra.mxu0 %v535
        %555 = vmatprep.subr.mxu0 0.0
        %556 = vmatpush1.msra.mxu0 0.0
        %557 = vmatprep.subr.mxu0 0.0
        %558 = vmatpush1.msra.mxu0 0.0
        %559 = vmatprep.subr.mxu0 0.0
        %560 = vmatpush1.msra.mxu0 0.0
        %561 = vmatprep.subr.mxu0 0.0
        %562 = vmatpush1.msra.mxu0 0.0
        %563 = vmatprep.subr.mxu0 0.0
        %564 = vmatpush1.msra.mxu0 0.0
        %565 = vmatprep.subr.mxu0 0.0
        %566 = vmatpush1.msra.mxu0 0.0
        %567 = vmatprep.subr.mxu0 0.0
        %568 = vmatpush1.msra.mxu0 0.0
        %569 = vmatprep.subr.mxu0 0.0
        %570 = vmatpush1.msra.mxu0 0.0
        %571 = vmatprep.subr.mxu0 0.0
        %572 = vmatpush1.msra.mxu0 0.0
        %573 = vmatprep.subr.mxu0 0.0
        %574 = vmatpush1.msra.mxu0 0.0
        %575 = vmatprep.subr.mxu0 0.0
        %576 = vmatpush1.msra.mxu0 0.0
        %577 = vmatprep.subr.mxu0 0.0
        %578 = vmatpush1.msra.mxu0 0.0
        %579 = vmatprep.subr.mxu0 0.0
        %580 = vmatpush1.msra.mxu0 0.0
        %581 = vmatprep.subr.mxu0 0.0
        %582 = vmatpush1.msra.mxu0 0.0
        %583 = vmatprep.subr.mxu0 0.0
        %584 = vmatpush1.msra.mxu0 0.0
        %585 = vmatprep.subr.mxu0 0.0
        %586 = vmatpush1.msra.mxu0 0.0
        %587 = vmatprep.subr.mxu0 0.0
        %588 = vmatpush1.msra.mxu0 0.0
        %589 = vmatprep.subr.mxu0 0.0
        %590 = vmatpush1.msra.mxu0 0.0
        %591 = vmatprep.subr.mxu0 0.0
        %592 = vmatpush1.msra.mxu0 0.0
        %593 = vmatprep.subr.mxu0 0.0
        %594 = vmatpush1.msra.mxu0 0.0
        %595 = vmatprep.subr.mxu0 0.0
        %596 = vmatpush1.msra.mxu0 0.0
        %597 = vmatprep.subr.mxu0 0.0
        %598 = vmatpush1.msra.mxu0 0.0
        %599 = vmatprep.subr.mxu0 0.0
        %600 = vmatpush1.msra.mxu0 0.0
        %601 = vmatprep.subr.mxu0 0.0
        %602 = vmatpush1.msra.mxu0 0.0
        %603 = vmatprep.subr.mxu0 0.0
        %604 = vmatpush1.msra.mxu0 0.0
        %605 = vmatprep.subr.mxu0 0.0
        %606 = vmatpush1.msra.mxu0 0.0
        %607 = vmatprep.subr.mxu0 0.0
        %608 = vmatpush1.msra.mxu0 0.0
        %609 = vmatprep.subr.mxu0 0.0
        %610 = vmatpush1.msra.mxu0 0.0
        %611 = vmatprep.mubr.f32.mxu0 0.0
        %612 = vmatmul.mubr.f32.gmra.mrb[0].mxu0 %v545
        %v613 = vpop.f32.mrb[0].mxu0
        %v614 = vadd.f32 %v541, %v613
        %v615 = vpop.f32.mrb[0].mxu0
        %616 = vdwg.mxu0
        %v617 = vrot.slane %v614, 4
        %v618 = vmax.f32 %v614, %v617
        %v619 = vrot.slane %v618, 2
        %v620 = vmax.f32 %v618, %v619
        %v621 = vrot.slane %v620, 1
        %v622 = vmax.f32 %v620, %v621
        %v623 = vsub.f32 %v614, %v622
        %v624 = vmul.f32 %v623, 1.442695
        %v625 = vpow.pop %v624
        %v626 = vrot.slane %v625, 4
        %v627 = vadd.f32 %v625, %v626
        %v628 = vrot.slane %v627, 2
        %v629 = vadd.f32 %v627, %v628
        %v630 = vrot.slane %v629, 1
        %v631 = vadd.f32 %v629, %v630
        %v632 = vrcp.pop %v631
        %v633 = vmul.f32 %v625, %v632
        %634 = vst [vmem:[%s289] sm:$0xff] %v633
        %v635 = vlog2.pop %v631
        %v636 = vmul.f32 %v635, 0.6931472
        %v637 = vsub.f32 %v623, %v636
        %v638 = vld [vmem:[%s306] sm:$0xff]
        %v639 = vadd.f32 %v637, %v638
        %v640 = vrot.slane %v639, 4
        %v641 = vmax.f32 %v639, %v640
        %v642 = vrot.slane %v641, 2
        %v643 = vmax.f32 %v641, %v642
        %v644 = vrot.slane %v643, 1
        %v645 = vmax.f32 %v643, %v644
        %v646 = vlaneseq
        %v647 = vshrl.u32 %v646, 7
        %vm648 = vcmp.eq.f32.partialorder %v639, %v645
        %v649 = vsel %vm648, %v647, 8
        %v650 = vrot.slane %v649, 4
        %vm651 = vcmp.lt.s32.totalorder %v649, %v650
        %v652 = vsel %vm651, %v649, %v650
        %v653 = vrot.slane %v652, 2
        %vm654 = vcmp.lt.s32.totalorder %v652, %v653
        %v655 = vsel %vm654, %v652, %v653
        %v656 = vrot.slane %v655, 1
        %vm657 = vcmp.lt.s32.totalorder %v655, %v656
        %v658 = vsel %vm657, %v655, %v656
        %vm659 = vcmp.eq.s32.totalorder %v647, %v658
        %v660 = vsel %vm659, %v637, 0.0
        %v661 = vrot.slane %v660, 4
        %v662 = vadd.f32 %v660, %v661
        %v663 = vrot.slane %v662, 2
        %v664 = vadd.f32 %v662, %v663
        %v665 = vrot.slane %v664, 1
        %v666 = vadd.f32 %v664, %v665
        %667 = vst [vmem:[%s296] sm:$0x1] %v666
        %v668 = vcvt.s32.f32 %v658
        %669 = vst [vmem:[%s296 + $0x1] sm:$0x1] %v668
        %s670 = sand.u32 %s169, 1
        %s671 = scalar_lea.sflag [#allocation3], %s670
        %s672 = sand.u32 %s169, 1
        %s673 = smul.addr %s672, 8
        %s674 = scalar_lea.vmem [#allocation2], %s673
        %s675 = sand.u32 %s195, 1
        %s676 = scalar_lea.sflag [#allocation5], %s675
        %s677 = sand.u32 %s195, 1
        %s678 = smul.addr %s677, 2
        %s679 = scalar_lea.vmem [#allocation4], %s678
        // Predicated region
        $region45: #{tpu_custom_call.1} parent=43 // pred_check
          %p680 = pneg %p179
        $region46: #{tpu_custom_call.1} parent=43 // pred_check_branch
          %682 = sbr.rel (%p680) target = $region48
        $region47: #{tpu_custom_call.1} parent=43 // pred_region
          %s684 = ssub.s32 128, 128
          %685 = vsyncadd %s671, %s684
          %s686 = smul.addr %s25, 128
          %s687 = scalar_lea.hbm %s6, %s686
          %s689 = sshll.u32 %s674, 4
          %s690 = int_to_ptr.vmem [resolvable:$true] %s689
          %692 = dma.vmem_to_hbm [thread:$0]  %s690, 128, %s687, %s671
        $region48: #{tpu_custom_call.1} parent=43 // pred_fallthru
          _
        // Predicated region
        $region49: #{tpu_custom_call.1} parent=43 // pred_check
          %p693 = pneg %p205
        $region50: #{tpu_custom_call.1} parent=43 // pred_check_branch
          %695 = sbr.rel (%p693) target = $region52
        $region51: #{tpu_custom_call.1} parent=43 // pred_region
          %s697 = ssub.s32 32, 32
          %698 = vsyncadd %s676, %s697
          %s699 = smul.addr %s25, 32
          %s700 = scalar_lea.hbm %s7, %s699
          %s702 = sshll.u32 %s679, 4
          %s703 = int_to_ptr.vmem [resolvable:$true] %s702
          %705 = dma.vmem_to_hbm [thread:$0]  %s703, 32, %s700, %s676
        $region52: #{tpu_custom_call.1} parent=43 // pred_fallthru
          _
      $region44: #{tpu_custom_call.1} parent=5 // pred_fallthru
        _
      %p706 = scmp.le.s32.totalorder 2, %s20
      // Predicated region
      $region53: #{tpu_custom_call.1} parent=5 // pred_check
        %p707 = pneg %p706
      $region54: #{tpu_custom_call.1} parent=5 // pred_check_branch
        %709 = sbr.rel (%p707) target = $region56
      $region55: #{tpu_custom_call.1} parent=5 // pred_region
        %s710 = ssub.s32 %s20, 2
        // Predicated region
        $region57: #{tpu_custom_call.1} parent=55 // pred_check
          %p711 = pneg %p185
        $region58: #{tpu_custom_call.1} parent=55 // pred_check_branch
          %713 = sbr.rel (%p711) target = $region60
        $region59: #{tpu_custom_call.1} parent=55 // pred_region
          %s714 = sand.u32 %s170, 1
          %s715 = scalar_lea.sflag [#allocation3], %s714
          %s716 = sand.u32 %s170, 1
          %s717 = smul.addr %s716, 8
          %s718 = scalar_lea.vmem [#allocation2], %s717
          %719 = dma.done %s715, 128
        $region60: #{tpu_custom_call.1} parent=55 // pred_fallthru
          _
        // Predicated region
        $region61: #{tpu_custom_call.1} parent=55 // pred_check
          %p720 = pneg %p211
        $region62: #{tpu_custom_call.1} parent=55 // pred_check_branch
          %722 = sbr.rel (%p720) target = $region64
        $region63: #{tpu_custom_call.1} parent=55 // pred_region
          %s723 = sand.u32 %s196, 1
          %s724 = scalar_lea.sflag [#allocation5], %s723
          %s725 = sand.u32 %s196, 1
          %s726 = smul.addr %s725, 2
          %s727 = scalar_lea.vmem [#allocation4], %s726
          %728 = dma.done %s724, 32
        $region64: #{tpu_custom_call.1} parent=55 // pred_fallthru
          _
      $region56: #{tpu_custom_call.1} parent=5 // pred_fallthru
        _
    $region6: #{tpu_custom_call.1} parent=1 // loop_footer
      %s24 = sadd.s32 1, %s20
    $region7: #{tpu_custom_call.1} parent=1 // loop_footer_branch
      %19 = sbr.rel target = $region3
    $region8: #{tpu_custom_call.1} parent=1 // loop_exit
      _
    %729 = vsyncpa [#allocation3], 1
    %s730 = scalar_lea.sflag [#allocation3], 1
    %731 = vsyncpa %s730, 1
    %732 = vsyncpa [#allocation5], 1
    %s733 = scalar_lea.sflag [#allocation5], 1
    %734 = vsyncpa %s733, 1

</llo_original>
